<compile_context>
chip_gen: v7x
topology: tpu7x:2x2x1
jax: 0.10.0
libtpu: 0.0.40
codegen_flags: <defaults>
</compile_context>

<pallas_src>
import jax
import jax.numpy as jnp
from jax.experimental import pallas as pl
from jax.experimental.pallas import tpu as pltpu


def _negation_kernel(x_ref, w_ref, keep_ref, o_ref):
    # x_ref:    (TB, F) streamed input tile
    # w_ref:    (1,  F) per-output weight (resident)
    # keep_ref: (1,  F) 1.0 where output is kept, 0.0 where zero_outputs (resident)
    # o_ref:    (TB, F) output tile
    xw = x_ref[...] * w_ref[...]                       # (1,F) broadcasts over rows
    o_ref[...] = jnp.where(keep_ref[...] != 0, xw, jnp.zeros_like(xw))


def negation_layer_forward(x, weight, zero_outputs):
    """x: (B, F) float; weight: (F,) float; zero_outputs: (F,) bool."""
    B, F = x.shape
    dtype = x.dtype
    itemsize = jnp.dtype(dtype).itemsize
    sub_mult = max(8, 32 // itemsize)      # packed sublane rows: 8 f32, 16 bf16, 32 i8

    # Tiny (1, F) resident operands; only these get touched outside the kernel.
    w_row = weight.astype(dtype).reshape(1, F)
    keep_row = jnp.where(zero_outputs, 0, 1).astype(dtype).reshape(1, F)

    # Batch tile: ~6 MiB of x per tile (so 2x(x) + 2x(out) ~= 24 MiB live VMEM),
    # rounded to the packed sublane multiple, capped at 16384 rows and at B.
    TILE_BYTES = 6 * 1024 * 1024
    MAX_ROWS = 16384
    bytes_per_row = max(F * itemsize, 1)
    tb = (TILE_BYTES // bytes_per_row) // sub_mult * sub_mult
    if B <= sub_mult:
        tb = B                                   # block == full batch dim is allowed
    else:
        b_floor = (B // sub_mult) * sub_mult
        tb = max(sub_mult, min(tb, MAX_ROWS, b_floor))

    grid = (pl.cdiv(B, tb),)                     # ragged last block handled by Pallas

    tile_bytes = tb * F * itemsize
    # 32 MiB covers the target tiling on v5e/v6e/v7x; bump only if a single huge
    # row forces a bigger tile (stays under v7x's 64 MiB physical VMEM in practice).
    vmem_limit = max(32 << 20, 4 * tile_bytes + (2 << 20))

    out = pl.pallas_call(
        _negation_kernel,
        out_shape=jax.ShapeDtypeStruct((B, F), dtype),
        grid_spec=pl.GridSpec(
            grid=grid,
            in_specs=[
                pl.BlockSpec((tb, F), lambda i: (i, 0)),   # x: streamed per batch tile
                pl.BlockSpec((1, F), lambda i: (0, 0)),    # weight: resident
                pl.BlockSpec((1, F), lambda i: (0, 0)),    # keep mask: resident
            ],
            out_specs=pl.BlockSpec((tb, F), lambda i: (i, 0)),
        ),
        compiler_params=pltpu.CompilerParams(
            # Independent batch tiles -> shard across TensorCores where available.
            dimension_semantics=("parallel",),
            vmem_limit_bytes=vmem_limit,
        ),
    )(x, w_row, keep_row)
    return out


def build_weight(item_theta_relationships, weight_param, inputs_per_item):
    """Plain-JAX glue: reconstruct the full per-output weight vector.

    weight[~zero_weights] = weight_param.repeat_interleave(inputs_per_item)
    where zero_weights = (1 - item_theta_relationships).repeat_interleave(ipi).bool()
    """
    if weight_param.shape[0] == 0:
        return jnp.zeros(
            item_theta_relationships.shape[0] * inputs_per_item, dtype=jnp.float32
        )
    active_idx = jnp.cumsum(item_theta_relationships) - 1
    per_item = jnp.where(
        item_theta_relationships.astype(bool),
        weight_param[jnp.clip(active_idx, 0, weight_param.shape[0] - 1)],
        0.0,
    )
    return jnp.repeat(per_item, inputs_per_item)


def _reference(x, weight, zero_outputs):
    x_zeroed = jnp.where(zero_outputs[None, :], 0.0, x)
    return x_zeroed * weight[None, :]


if __name__ == "__main__":
    key = jax.random.PRNGKey(0)
    k_x, k_rel, k_zero, k_wp, k_x2 = jax.random.split(key, 5)

    # Small, TPU-friendly shapes: 16 items x 8 inputs/item = 128 outputs, batch 8.
    batch = 8
    items = 16
    inputs_per_item = 8
    out_features = items * inputs_per_item

    item_theta_relationships = (
        jax.random.uniform(k_rel, (items,)) > 0.3
    ).astype(jnp.int32)                                               # (items,) 0/1
    zero_outputs = jax.random.uniform(k_zero, (out_features,)) > 0.8  # (F,) bool
    n_active = int(jnp.sum(item_theta_relationships))
    # nn.init.zeros_ would zero everything; use a nonzero deterministic init so
    # the multiply is actually exercised.
    weight_param = jax.random.normal(k_wp, (n_active,), dtype=jnp.float32)
    weight = build_weight(item_theta_relationships, weight_param, inputs_per_item)

    x = jax.random.normal(k_x, (batch, out_features), dtype=jnp.float32)
    out = jax.block_until_ready(negation_layer_forward(x, weight, zero_outputs))
    ref = _reference(x, weight, zero_outputs)
    assert out.shape == ref.shape, "shape mismatch vs reference"
    assert jnp.allclose(out, ref, atol=1e-6, rtol=1e-6), "mismatch vs reference"

    # Second check: ragged batch (not a multiple of the sublane count / tile) and
    # an Inf placed in a masked column to verify exact zeroing semantics.
    batch2 = 37
    x2 = jax.random.normal(k_x2, (batch2, out_features), dtype=jnp.float32)
    masked_cols = jnp.nonzero(zero_outputs, size=1, fill_value=0)[0]
    x2 = x2.at[0, masked_cols[0]].set(jnp.inf)
    out2 = jax.block_until_ready(negation_layer_forward(x2, weight, zero_outputs))
    ref2 = _reference(x2, weight, zero_outputs)
    assert out2.shape == ref2.shape, "shape mismatch vs reference (ragged)"
    assert jnp.allclose(out2, ref2, atol=1e-6, rtol=1e-6), "mismatch vs reference (ragged)"

    print("KERNEL_OK")
</pallas_src>

<mosaic_0001>
module attributes {stable_mosaic.version = 11 : i64} {
  func.func @_negation_kernel(%arg0: i32, %arg1: memref<8x128xf32, #tpu.memory_space<vmem>>, %arg2: memref<1x128xf32, #tpu.memory_space<vmem>>, %arg3: memref<1x128xf32, #tpu.memory_space<vmem>>, %arg4: memref<8x128xf32, #tpu.memory_space<vmem>>) attributes {dimension_semantics = [#tpu.dimension_semantics<parallel>], iteration_bounds = array<i64: 1>, scalar_prefetch = 0 : i64, scratch_operands = 0 : i64, tpu.core_type = #tpu.core_type<tc>, window_params = [{transform_indices = @transform_0, window_bounds = array<i64: 8, 128>}, {pipeline_mode = #tpu.pipeline_mode<synchronous>, transform_indices = @transform_1, window_bounds = array<i64: 1, 128>}, {pipeline_mode = #tpu.pipeline_mode<synchronous>, transform_indices = @transform_2, window_bounds = array<i64: 1, 128>}, {transform_indices = @transform_3, window_bounds = array<i64: 8, 128>}]} {
    %c0 = arith.constant 0 : index
    %c0_0 = arith.constant 0 : index
    %0 = vector.load %arg1[%c0, %c0_0] : memref<8x128xf32, #tpu.memory_space<vmem>>, vector<8x128xf32>
    %c0_1 = arith.constant 0 : index
    %c0_2 = arith.constant 0 : index
    %1 = vector.load %arg2[%c0_1, %c0_2] : memref<1x128xf32, #tpu.memory_space<vmem>>, vector<1x128xf32>
    %2 = vector.broadcast %1 : vector<1x128xf32> to vector<8x128xf32>
    %3 = arith.mulf %0, %2 : vector<8x128xf32>
    %c0_3 = arith.constant 0 : index
    %c0_4 = arith.constant 0 : index
    %4 = vector.load %arg3[%c0_3, %c0_4] : memref<1x128xf32, #tpu.memory_space<vmem>>, vector<1x128xf32>
    %cst = arith.constant 0.000000e+00 : f32
    %5 = vector.broadcast %cst : f32 to vector<1x128xf32>
    %6 = arith.cmpf one, %4, %5 : vector<1x128xf32>
    %cst_5 = arith.constant 0.000000e+00 : f32
    %7 = vector.broadcast %cst_5 : f32 to vector<8x128xf32>
    %8 = vector.shape_cast %6 : vector<1x128xi1> to vector<1x128xi1>
    %9 = vector.broadcast %8 : vector<1x128xi1> to vector<8x128xi1>
    %10 = arith.select %9, %3, %7 : vector<8x128xi1>, vector<8x128xf32>
    %c0_6 = arith.constant 0 : index
    %c0_7 = arith.constant 0 : index
    %11 = vector.load %arg4[%c0_6, %c0_7] : memref<8x128xf32, #tpu.memory_space<vmem>>, vector<8x128xf32>
    tpu.vector_store %arg4[%c0_6, %c0_7], %10 {strides = array<i32>} : memref<8x128xf32, #tpu.memory_space<vmem>>, vector<8x128xf32>,
    return
  }
  func.func @transform_0(%arg0: i32) -> (i32, i32) {
    %c0_i32 = arith.constant 0 : i32
    %c0_i32_0 = arith.constant 0 : i32
    return %arg0, %c0_i32 : i32, i32
  }
  func.func @transform_1(%arg0: i32) -> (i32, i32) {
    %c0_i32 = arith.constant 0 : i32
    %c0_i32_0 = arith.constant 0 : i32
    %c0_i32_1 = arith.constant 0 : i32
    return %c0_i32, %c0_i32_0 : i32, i32
  }
  func.func @transform_2(%arg0: i32) -> (i32, i32) {
    %c0_i32 = arith.constant 0 : i32
    %c0_i32_0 = arith.constant 0 : i32
    %c0_i32_1 = arith.constant 0 : i32
    return %c0_i32, %c0_i32_0 : i32, i32
  }
  func.func @transform_3(%arg0: i32) -> (i32, i32) {
    %c0_i32 = arith.constant 0 : i32
    %c0_i32_0 = arith.constant 0 : i32
    return %arg0, %c0_i32 : i32, i32
  }
}

</mosaic_0001>

<llo_original>
// kernel: tpu_custom_call.1
$region0: #{tpu_custom_call.1}
  #allocation0 [shape = 'u32[]', space=smem, size = 0x4, offset = 0x4, fixed_abs, tag = 'smem constant byte address 0x4 - core index']
  #allocation1 [shape = 'u32[144,128]{1,0:T(1,128)}', space=vmem, size = 0x12000, scoped, tag = 'internal scratch']
  %s0 = inlined_call_operand.hbm [shape: f32[8,128], index: 0, kind: input, shape index: {}]
  %s1 = inlined_call_operand.vmem [shape: f32[1,128], index: 1, kind: input, shape index: {}]
  %s2 = inlined_call_operand.vmem [shape: f32[1,128], index: 2, kind: input, shape index: {}]
  %s3 = inlined_call_operand.hbm [shape: f32[8,128], index: 3, kind: output, shape index: {}]
  %s4 = sld [smem:[#allocation0]]
  $region26: #{tpu_custom_call.1} parent=0
    _
  %s6 = ssub.s32 1, %s4
  %s7 = scalar_select 0, %s6, %s4
  $region1: #{tpu_custom_call.1} parent=0
    #allocation2 [shape = 'u8[4096]{0}', space=vmem, size = 0x1000, scoped, tag = 'input window, operand 0, single buffered']
    #allocation3 [shape = 's32[1]{0}', space=sflag, size = 0x4, scoped, tag = 'scoped memory for tpu_custom_call.1']
    #allocation4 [shape = 's32[1]{0}', space=sflag, size = 0x4, scoped, tag = 'scoped memory for tpu_custom_call.1']
    #allocation5 [shape = 'u8[4096]{0}', space=vmem, size = 0x1000, scoped, tag = 'output window, operand 0, single buffered']
    %8 = vsyncpa [#allocation3], 0
    %9 = vsyncpa [#allocation4], 0
    // Predicated region
    $region2: #{tpu_custom_call.1} parent=1 // pred_check
      _
    $region3: #{tpu_custom_call.1} parent=1 // pred_check_branch
      %11 = sbr.rel (0) target = $region5
    $region4: #{tpu_custom_call.1} parent=1 // pred_region
      %s13 = ssub.s32 128, 128
      %14 = vsyncadd [#allocation3], %s13
      %s16 = sshll.u32 [#allocation2], 4
      %s17 = int_to_ptr.vmem [resolvable:$true] %s16
      %19 = dma.hbm_to_vmem [thread:$0]  %s0, 128, %s17, [#allocation3]
    $region5: #{tpu_custom_call.1} parent=1 // pred_fallthru
      _
    // Predicated region
    $region6: #{tpu_custom_call.1} parent=1 // pred_check
      _
    $region7: #{tpu_custom_call.1} parent=1 // pred_check_branch
      %21 = sbr.rel (0) target = $region9
    $region8: #{tpu_custom_call.1} parent=1 // pred_region
      _
    $region9: #{tpu_custom_call.1} parent=1 // pred_fallthru
      _
    // Predicated region
    $region10: #{tpu_custom_call.1} parent=1 // pred_check
      _
    $region11: #{tpu_custom_call.1} parent=1 // pred_check_branch
      %23 = sbr.rel (0) target = $region13
    $region12: #{tpu_custom_call.1} parent=1 // pred_region
      _
    $region13: #{tpu_custom_call.1} parent=1 // pred_fallthru
      _
    // Predicated region
    $region14: #{tpu_custom_call.1} parent=1 // pred_check
      _
    $region15: #{tpu_custom_call.1} parent=1 // pred_check_branch
      %25 = sbr.rel (0) target = $region17
    $region16: #{tpu_custom_call.1} parent=1 // pred_region
      %26 = dma.done [#allocation3], 128
    $region17: #{tpu_custom_call.1} parent=1 // pred_fallthru
      _
    %v27 = vld [vmem:[#allocation2] sm:$0xff]
    %v28 = vld [vmem:[%s1] sm:$0x1]
    %v30 = vlaneseq
    %v31 = vshrl.u32 %v30, 7
    %v32 = vsub.s32 0, %v31
    %v33 = vrot.slane %v28, %v32
    %v35 = vmul.f32 %v27, %v33
    %v36 = vld [vmem:[%s2] sm:$0x1]
    %vm37 = vcmp.ne.f32.partialorder %v36, 0.0
    %v38 = vsel %vm37, 1, 0
    %v39 = vlaneseq
    %v40 = vshrl.u32 %v39, 7
    %v41 = vsub.s32 0, %v40
    %v42 = vrot.slane %v38, %v41
    %vm43 = vcmp.eq.s32.totalorder %v42, 1
    %v44 = vsel %vm43, %v35, 0.0
    %45 = vst [vmem:[#allocation5] sm:$0xff] %v44
    // Predicated region
    $region18: #{tpu_custom_call.1} parent=1 // pred_check
      _
    $region19: #{tpu_custom_call.1} parent=1 // pred_check_branch
      %47 = sbr.rel (0) target = $region21
    $region20: #{tpu_custom_call.1} parent=1 // pred_region
      %s49 = ssub.s32 128, 128
      %50 = vsyncadd [#allocation4], %s49
      %s52 = sshll.u32 [#allocation5], 4
      %s53 = int_to_ptr.vmem [resolvable:$true] %s52
      %55 = dma.vmem_to_hbm [thread:$0]  %s53, 128, %s3, [#allocation4]
    $region21: #{tpu_custom_call.1} parent=1 // pred_fallthru
      _
    // Predicated region
    $region22: #{tpu_custom_call.1} parent=1 // pred_check
      _
    $region23: #{tpu_custom_call.1} parent=1 // pred_check_branch
      %57 = sbr.rel (0) target = $region25
    $region24: #{tpu_custom_call.1} parent=1 // pred_region
      %58 = dma.done [#allocation4], 128
    $region25: #{tpu_custom_call.1} parent=1 // pred_fallthru
      _
    %59 = vsyncpa [#allocation3], 1
    %60 = vsyncpa [#allocation4], 1

</llo_original>
